<compile_context>
chip_gen: v5e
topology: v5e:2x2
jax: 0.10.0
libtpu: 0.0.40
codegen_flags: <defaults>
</compile_context>

<pallas_src>
import functools

import jax
import jax.numpy as jnp
from jax.experimental import pallas as pl
from jax.experimental.pallas import tpu as pltpu


_GATES = ("i", "f", "o", "g")      # packed gate order within each hidden tile
_LANE = 128                        # lane tile
_SUBLANE = 8                       # f32 sublane tile
_MAX_TB = 256                      # max batch tile (review: 128-512 sweet spot)


def _round_up(v, m):
    return (v + m - 1) // m * m


def _sigmoid_via_tanh(x):
    # Exact identity sigmoid(x) = 0.5*(tanh(x/2)+1); one EUP op per element.
    return 0.5 * (jnp.tanh(0.5 * x) + 1.0)


def _hidden_tiling(hidden_dim):
    """Padded hidden dim, hidden column tile (tn), number of tiles."""
    h_pad = _round_up(hidden_dim, _LANE)
    tn = 256 if h_pad % 256 == 0 else _LANE
    return h_pad, tn, h_pad // tn


def _batch_tiling(batch):
    """Batch tile and padded batch."""
    if batch <= _MAX_TB:
        tb = _round_up(batch, _SUBLANE)
        return tb, tb
    return _MAX_TB, _round_up(batch, _MAX_TB)


def _pad_to(arr, rows, cols):
    """Zero-pad `arr` to (rows, cols) f32; pass through if already correct."""
    r, c = arr.shape
    if r == rows and c == cols and arr.dtype == jnp.float32:
        return arr
    return jnp.zeros((rows, cols), jnp.float32).at[:r, :c].set(
        arr.astype(jnp.float32))


def _lstm_cell_kernel(x_ref, h_ref, c_ref, wx_ref, wh_ref, b_ref,
                      c_out_ref, h_out_ref, *, tn):
    """One LSTM-cell step for a (batch tile, hidden-column tile) grid point.

    x_ref:  (TB, Dp)        input activations
    h_ref:  (TB, Hp)        previous hidden state (full K dim)
    c_ref:  (TB, tn)        previous cell state, this hidden tile
    wx_ref: (Dp, 4*tn)      packed x-weights, gate-interleaved for this tile
    wh_ref: (Hp, 4*tn)      packed h-weights, gate-interleaved for this tile
    b_ref:  (1, 4*tn)       fused bias (b_x + b_h) for this tile (f32)
    c_out_ref / h_out_ref: (TB, tn)
    """
    wdtype = wx_ref.dtype   # bf16 (or f32) MXU inputs, f32 accumulation
    gates = jnp.dot(x_ref[...].astype(wdtype), wx_ref[...],
                    preferred_element_type=jnp.float32)
    gates = gates + jnp.dot(h_ref[...].astype(wdtype), wh_ref[...],
                            preferred_element_type=jnp.float32)
    gates = gates + b_ref[...]

    # Lane-aligned gate slices (tn is a multiple of 128), order [i, f, o, g].
    i_gate = _sigmoid_via_tanh(gates[:, 0 * tn:1 * tn])
    f_gate = _sigmoid_via_tanh(gates[:, 1 * tn:2 * tn])
    o_gate = _sigmoid_via_tanh(gates[:, 2 * tn:3 * tn])
    g_cur = jnp.tanh(gates[:, 3 * tn:4 * tn])

    c_new = f_gate * c_ref[...] + i_gate * g_cur
    h_new = o_gate * jnp.tanh(c_new)

    c_out_ref[...] = c_new.astype(c_out_ref.dtype)
    h_out_ref[...] = h_new.astype(h_out_ref.dtype)


def pack_iterative_lstm_params(params, input_dim, hidden_dim,
                               dtype=jnp.bfloat16):
    """Pack the 8 nn.Linear (weight, bias) pairs into (Wx, Wh, b).

    params: dict "xi","hi","xf","hf","xo","ho","xg","hg" -> (weight (H, in),
    bias (H,)) in PyTorch nn.Linear layout.

    Column layout is gate-interleaved per hidden tile: for tile j the columns
    [j*4*tn, (j+1)*4*tn) hold [i | f | o | g] for hidden slice [j*tn, (j+1)*tn),
    so a BlockSpec over 4*tn columns streams exactly one tile's weights.
    Returns Wx (Dp, NT*4*tn) and Wh (Hp, NT*4*tn) in `dtype`, b (1, NT*4*tn) f32.
    """
    d_pad = _round_up(input_dim, _SUBLANE)
    h_pad, tn, n_tiles = _hidden_tiling(hidden_dim)

    wx_p = jnp.zeros((d_pad, n_tiles * 4 * tn), jnp.float32)
    wh_p = jnp.zeros((h_pad, n_tiles * 4 * tn), jnp.float32)
    b_p = jnp.zeros((1, n_tiles * 4 * tn), jnp.float32)

    for j in range(n_tiles):
        lo = j * tn
        hi = min((j + 1) * tn, hidden_dim)
        if lo >= hidden_dim:
            break                      # pure padding tile
        width = hi - lo
        for k, gate in enumerate(_GATES):
            wxg, bxg = params["x" + gate]      # (H, D), (H,)
            whg, bhg = params["h" + gate]      # (H, H), (H,)
            col = j * 4 * tn + k * tn
            wx_p = wx_p.at[:input_dim, col:col + width].set(wxg.T[:, lo:hi])
            wh_p = wh_p.at[:hidden_dim, col:col + width].set(whg.T[:, lo:hi])
            b_p = b_p.at[0, col:col + width].set(bxg[lo:hi] + bhg[lo:hi])

    return wx_p.astype(dtype), wh_p.astype(dtype), b_p


def iterative_lstm_step(x, c_prev, h_prev, wx_packed, wh_packed, b_packed):
    """One LSTM cell step (matches IterativeLSTM.forward).

    x: (B, input_dim), c_prev/h_prev: (B, H)
    wx_packed/wh_packed/b_packed: from pack_iterative_lstm_params.
    Returns (c_current, h_current), each (B, H) float32.
    """
    B, d_in = x.shape
    H = c_prev.shape[-1]
    d_pad = wx_packed.shape[0]
    h_pad, tn, n_tiles = _hidden_tiling(H)
    assert d_in <= d_pad and wh_packed.shape[0] == h_pad
    assert wx_packed.shape[1] == n_tiles * 4 * tn

    tb, b_pad = _batch_tiling(B)

    # Fast-path: these are pass-throughs when shapes already match the padded
    # layout (no fresh HBM copies for pre-padded activations).
    x_p = _pad_to(x, b_pad, d_pad)
    h_p = _pad_to(h_prev, b_pad, h_pad)
    c_p = _pad_to(c_prev, b_pad, h_pad)

    kernel = functools.partial(_lstm_cell_kernel, tn=tn)

    # VMEM budget from actual double-buffered block sizes (cap: v7x 64 MiB).
    w_item = jnp.dtype(wx_packed.dtype).itemsize
    per_buf = (tb * d_pad * 4                      # x tile
               + tb * h_pad * 4                    # h tile
               + tb * tn * 4                       # c tile
               + (d_pad + h_pad) * 4 * tn * w_item  # Wx + Wh tiles
               + 4 * tn * 4                        # bias tile
               + 2 * tb * tn * 4)                  # two output tiles
    vmem_limit = int(min(max(2 * per_buf + (1 << 20), 16 << 20), 64 << 20))

    # TODO(synk): on v7x builds where plain "parallel" does not split the grid
    # across the two TensorCores, switch this axis to pltpu.CORE_PARALLEL.
    c_out, h_out = pl.pallas_call(
        kernel,
        out_shape=(jax.ShapeDtypeStruct((b_pad, h_pad), jnp.float32),
                   jax.ShapeDtypeStruct((b_pad, h_pad), jnp.float32)),
        grid=(b_pad // tb, n_tiles),
        in_specs=[
            pl.BlockSpec((tb, d_pad), lambda i, j: (i, 0)),        # x
            pl.BlockSpec((tb, h_pad), lambda i, j: (i, 0)),        # h_prev
            pl.BlockSpec((tb, tn), lambda i, j: (i, j)),           # c_prev
            pl.BlockSpec((d_pad, 4 * tn), lambda i, j: (0, j)),    # Wx tile
            pl.BlockSpec((h_pad, 4 * tn), lambda i, j: (0, j)),    # Wh tile
            pl.BlockSpec((1, 4 * tn), lambda i, j: (0, j)),        # bias tile
        ],
        out_specs=(pl.BlockSpec((tb, tn), lambda i, j: (i, j)),    # c_new
                   pl.BlockSpec((tb, tn), lambda i, j: (i, j))),   # h_new
        compiler_params=pltpu.CompilerParams(
            dimension_semantics=("parallel", "parallel"),
            vmem_limit_bytes=vmem_limit,
        ),
    )(x_p, h_p, c_p, wx_packed, wh_packed, b_packed)

    if b_pad == B and h_pad == H:
        return c_out, h_out
    return c_out[:B, :H], h_out[:B, :H]


def _reference(x, c_prev, h_prev, params):
    """Pure-JAX reference mirroring the PyTorch forward exactly."""
    def lin(p, v):
        w, b = p
        return v @ w.T + b
    i = jax.nn.sigmoid(lin(params["xi"], x) + lin(params["hi"], h_prev))
    f = jax.nn.sigmoid(lin(params["xf"], x) + lin(params["hf"], h_prev))
    o = jax.nn.sigmoid(lin(params["xo"], x) + lin(params["ho"], h_prev))
    g = jnp.tanh(lin(params["xg"], x) + lin(params["hg"], h_prev))
    c = f * c_prev + i * g
    h = o * jnp.tanh(c)
    return c, h


def _init_linear(key, in_dim, out_dim):
    # nn.Linear-style uniform init, deterministic.
    kw, kb = jax.random.split(key)
    bound = 1.0 / jnp.sqrt(in_dim)
    w = jax.random.uniform(kw, (out_dim, in_dim), jnp.float32, -bound, bound)
    b = jax.random.uniform(kb, (out_dim,), jnp.float32, -bound, bound)
    return w, b


if __name__ == "__main__":
    B, D_IN, HID = 2, 16, 32
    key = jax.random.PRNGKey(0)
    k_x, k_c, k_h, k_p = jax.random.split(key, 4)

    x = jax.random.normal(k_x, (B, D_IN), jnp.float32)
    c_prev = jax.random.normal(k_c, (B, HID), jnp.float32)
    h_prev = jax.random.normal(k_h, (B, HID), jnp.float32)

    names = ["xi", "hi", "xf", "hf", "xo", "ho", "xg", "hg"]
    pkeys = jax.random.split(k_p, len(names))
    params = {}
    for name, kk in zip(names, pkeys):
        fan_in = D_IN if name[0] == "x" else HID
        params[name] = _init_linear(kk, fan_in, HID)

    c_ref, h_ref = _reference(x, c_prev, h_prev, params)

    # f32 weight path: exact numerics (1e-5 vs reference).
    wx32, wh32, b32 = pack_iterative_lstm_params(params, D_IN, HID,
                                                 dtype=jnp.float32)
    c32, h32 = iterative_lstm_step(x, c_prev, h_prev, wx32, wh32, b32)
    jax.block_until_ready((c32, h32))
    assert c32.shape == (B, HID) and h32.shape == (B, HID)
    assert jnp.allclose(c32, c_ref, atol=1e-5, rtol=1e-5)
    assert jnp.allclose(h32, h_ref, atol=1e-5, rtol=1e-5)

    # bf16 weight path (default / recommended): f32 accumulation, looser
    # tolerance expected from the bf16 mantissa.
    wxbf, whbf, bbf = pack_iterative_lstm_params(params, D_IN, HID,
                                                 dtype=jnp.bfloat16)
    cbf, hbf = iterative_lstm_step(x, c_prev, h_prev, wxbf, whbf, bbf)
    jax.block_until_ready((cbf, hbf))
    assert jnp.allclose(cbf, c_ref, atol=3e-2, rtol=3e-2)
    assert jnp.allclose(hbf, h_ref, atol=3e-2, rtol=3e-2)

    print("KERNEL_OK")
</pallas_src>

<mosaic_0001>
module attributes {stable_mosaic.version = 11 : i64} {
  func.func @_lstm_cell_kernel(%arg0: i32, %arg1: i32, %arg2: memref<8x16xf32, #tpu.memory_space<vmem>>, %arg3: memref<8x128xf32, #tpu.memory_space<vmem>>, %arg4: memref<8x128xf32, #tpu.memory_space<vmem>>, %arg5: memref<16x512xf32, #tpu.memory_space<vmem>>, %arg6: memref<128x512xf32, #tpu.memory_space<vmem>>, %arg7: memref<1x512xf32, #tpu.memory_space<vmem>>, %arg8: memref<8x128xf32, #tpu.memory_space<vmem>>, %arg9: memref<8x128xf32, #tpu.memory_space<vmem>>) attributes {dimension_semantics = [#tpu.dimension_semantics<parallel>, #tpu.dimension_semantics<parallel>], iteration_bounds = array<i64: 1, 1>, scalar_prefetch = 0 : i64, scratch_operands = 0 : i64, tpu.core_type = #tpu.core_type<tc>, window_params = [{transform_indices = @transform_0, window_bounds = array<i64: 8, 16>}, {transform_indices = @transform_1, window_bounds = array<i64: 8, 128>}, {transform_indices = @transform_2, window_bounds = array<i64: 8, 128>}, {transform_indices = @transform_3, window_bounds = array<i64: 16, 512>}, {transform_indices = @transform_4, window_bounds = array<i64: 128, 512>}, {transform_indices = @transform_5, window_bounds = array<i64: 1, 512>}, {transform_indices = @transform_6, window_bounds = array<i64: 8, 128>}, {transform_indices = @transform_7, window_bounds = array<i64: 8, 128>}]} {
    %c0 = arith.constant 0 : index
    %c0_0 = arith.constant 0 : index
    %0 = vector.load %arg2[%c0, %c0_0] : memref<8x16xf32, #tpu.memory_space<vmem>>, vector<8x16xf32>
    %c0_1 = arith.constant 0 : index
    %c0_2 = arith.constant 0 : index
    %1 = vector.load %arg5[%c0_1, %c0_2] : memref<16x512xf32, #tpu.memory_space<vmem>>, vector<16x512xf32>
    %cst = arith.constant dense<0.000000e+00> : vector<8x512xf32>
    %2 = tpu.matmul %0, %1, %cst {dimension_numbers = #tpu.dot_dimension_numbers<[1], [0], [0], [1], [0, 0, 1, 1], [], []>} : vector<8x16xf32>, vector<16x512xf32>, vector<8x512xf32> -> vector<8x512xf32>
    %c0_3 = arith.constant 0 : index
    %c0_4 = arith.constant 0 : index
    %3 = vector.load %arg3[%c0_3, %c0_4] : memref<8x128xf32, #tpu.memory_space<vmem>>, vector<8x128xf32>
    %c0_5 = arith.constant 0 : index
    %c0_6 = arith.constant 0 : index
    %4 = vector.load %arg6[%c0_5, %c0_6] : memref<128x512xf32, #tpu.memory_space<vmem>>, vector<128x512xf32>
    %cst_7 = arith.constant dense<0.000000e+00> : vector<8x512xf32>
    %5 = tpu.matmul %3, %4, %cst_7 {dimension_numbers = #tpu.dot_dimension_numbers<[1], [0], [0], [1], [0, 0, 1, 1], [], []>} : vector<8x128xf32>, vector<128x512xf32>, vector<8x512xf32> -> vector<8x512xf32>
    %6 = arith.addf %2, %5 : vector<8x512xf32>
    %c0_8 = arith.constant 0 : index
    %c0_9 = arith.constant 0 : index
    %7 = vector.load %arg7[%c0_8, %c0_9] : memref<1x512xf32, #tpu.memory_space<vmem>>, vector<1x512xf32>
    %8 = vector.broadcast %7 : vector<1x512xf32> to vector<8x512xf32>
    %9 = arith.addf %6, %8 : vector<8x512xf32>
    %10 = vector.extract_strided_slice %9 {offsets = [0, 0], sizes = [8, 128], strides = [1, 1]} : vector<8x512xf32> to vector<8x128xf32>
    %cst_10 = arith.constant 5.000000e-01 : f32
    %11 = vector.broadcast %cst_10 : f32 to vector<8x128xf32>
    %12 = arith.mulf %11, %10 : vector<8x128xf32>
    %13 = math.tanh %12 : vector<8x128xf32>
    %cst_11 = arith.constant 1.000000e+00 : f32
    %14 = vector.broadcast %cst_11 : f32 to vector<8x128xf32>
    %15 = arith.addf %13, %14 : vector<8x128xf32>
    %cst_12 = arith.constant 5.000000e-01 : f32
    %16 = vector.broadcast %cst_12 : f32 to vector<8x128xf32>
    %17 = arith.mulf %16, %15 : vector<8x128xf32>
    %18 = vector.extract_strided_slice %9 {offsets = [0, 128], sizes = [8, 128], strides = [1, 1]} : vector<8x512xf32> to vector<8x128xf32>
    %cst_13 = arith.constant 5.000000e-01 : f32
    %19 = vector.broadcast %cst_13 : f32 to vector<8x128xf32>
    %20 = arith.mulf %19, %18 : vector<8x128xf32>
    %21 = math.tanh %20 : vector<8x128xf32>
    %cst_14 = arith.constant 1.000000e+00 : f32
    %22 = vector.broadcast %cst_14 : f32 to vector<8x128xf32>
    %23 = arith.addf %21, %22 : vector<8x128xf32>
    %cst_15 = arith.constant 5.000000e-01 : f32
    %24 = vector.broadcast %cst_15 : f32 to vector<8x128xf32>
    %25 = arith.mulf %24, %23 : vector<8x128xf32>
    %26 = vector.extract_strided_slice %9 {offsets = [0, 256], sizes = [8, 128], strides = [1, 1]} : vector<8x512xf32> to vector<8x128xf32>
    %cst_16 = arith.constant 5.000000e-01 : f32
    %27 = vector.broadcast %cst_16 : f32 to vector<8x128xf32>
    %28 = arith.mulf %27, %26 : vector<8x128xf32>
    %29 = math.tanh %28 : vector<8x128xf32>
    %cst_17 = arith.constant 1.000000e+00 : f32
    %30 = vector.broadcast %cst_17 : f32 to vector<8x128xf32>
    %31 = arith.addf %29, %30 : vector<8x128xf32>
    %cst_18 = arith.constant 5.000000e-01 : f32
    %32 = vector.broadcast %cst_18 : f32 to vector<8x128xf32>
    %33 = arith.mulf %32, %31 : vector<8x128xf32>
    %34 = vector.extract_strided_slice %9 {offsets = [0, 384], sizes = [8, 128], strides = [1, 1]} : vector<8x512xf32> to vector<8x128xf32>
    %35 = math.tanh %34 : vector<8x128xf32>
    %c0_19 = arith.constant 0 : index
    %c0_20 = arith.constant 0 : index
    %36 = vector.load %arg4[%c0_19, %c0_20] : memref<8x128xf32, #tpu.memory_space<vmem>>, vector<8x128xf32>
    %37 = arith.mulf %25, %36 : vector<8x128xf32>
    %38 = arith.mulf %17, %35 : vector<8x128xf32>
    %39 = arith.addf %37, %38 : vector<8x128xf32>
    %40 = math.tanh %39 : vector<8x128xf32>
    %41 = arith.mulf %33, %40 : vector<8x128xf32>
    %c0_21 = arith.constant 0 : index
    %c0_22 = arith.constant 0 : index
    %42 = vector.load %arg8[%c0_21, %c0_22] : memref<8x128xf32, #tpu.memory_space<vmem>>, vector<8x128xf32>
    tpu.vector_store %arg8[%c0_21, %c0_22], %39 {strides = array<i32>} : memref<8x128xf32, #tpu.memory_space<vmem>>, vector<8x128xf32>,
    %c0_23 = arith.constant 0 : index
    %c0_24 = arith.constant 0 : index
    %43 = vector.load %arg9[%c0_23, %c0_24] : memref<8x128xf32, #tpu.memory_space<vmem>>, vector<8x128xf32>
    tpu.vector_store %arg9[%c0_23, %c0_24], %41 {strides = array<i32>} : memref<8x128xf32, #tpu.memory_space<vmem>>, vector<8x128xf32>,
    return
  }
  func.func @transform_0(%arg0: i32, %arg1: i32) -> (i32, i32) {
    %c0_i32 = arith.constant 0 : i32
    %c0_i32_0 = arith.constant 0 : i32
    return %arg0, %c0_i32 : i32, i32
  }
  func.func @transform_1(%arg0: i32, %arg1: i32) -> (i32, i32) {
    %c0_i32 = arith.constant 0 : i32
    %c0_i32_0 = arith.constant 0 : i32
    return %arg0, %c0_i32 : i32, i32
  }
  func.func @transform_2(%arg0: i32, %arg1: i32) -> (i32, i32) {
    %c0_i32 = arith.constant 0 : i32
    return %arg0, %arg1 : i32, i32
  }
  func.func @transform_3(%arg0: i32, %arg1: i32) -> (i32, i32) {
    %c0_i32 = arith.constant 0 : i32
    %c0_i32_0 = arith.constant 0 : i32
    return %c0_i32, %arg1 : i32, i32
  }
  func.func @transform_4(%arg0: i32, %arg1: i32) -> (i32, i32) {
    %c0_i32 = arith.constant 0 : i32
    %c0_i32_0 = arith.constant 0 : i32
    return %c0_i32, %arg1 : i32, i32
  }
  func.func @transform_5(%arg0: i32, %arg1: i32) -> (i32, i32) {
    %c0_i32 = arith.constant 0 : i32
    %c0_i32_0 = arith.constant 0 : i32
    return %c0_i32, %arg1 : i32, i32
  }
  func.func @transform_6(%arg0: i32, %arg1: i32) -> (i32, i32) {
    %c0_i32 = arith.constant 0 : i32
    return %arg0, %arg1 : i32, i32
  }
  func.func @transform_7(%arg0: i32, %arg1: i32) -> (i32, i32) {
    %c0_i32 = arith.constant 0 : i32
    return %arg0, %arg1 : i32, i32
  }
}

</mosaic_0001>

<llo_original>
// kernel: tpu_custom_call.1
$region0: #{tpu_custom_call.1}
  #allocation0 [shape = 'u32[]', space=smem, size = 0x4, offset = 0x4, fixed_abs, tag = 'smem constant byte address 0x4 - core index']
  #allocation1 [shape = 'u32[72,128]{1,0:T(1,128)}', space=vmem, size = 0x9000, scoped, tag = 'internal scratch']
  %s0 = inlined_call_operand.hbm [shape: f32[8,16], index: 0, kind: input, shape index: {}]
  %s1 = inlined_call_operand.hbm [shape: f32[8,128], index: 1, kind: input, shape index: {}]
  %s2 = inlined_call_operand.hbm [shape: f32[8,128], index: 2, kind: input, shape index: {}]
  %s3 = inlined_call_operand.hbm [shape: f32[16,512], index: 3, kind: input, shape index: {}]
  %s4 = inlined_call_operand.hbm [shape: f32[128,512], index: 4, kind: input, shape index: {}]
  %s5 = inlined_call_operand.vmem [shape: f32[1,512], index: 5, kind: input, shape index: {}]
  %s6 = inlined_call_operand.hbm [shape: f32[8,128], index: 6, kind: output, shape index: {0}]
  %s7 = inlined_call_operand.hbm [shape: f32[8,128], index: 7, kind: output, shape index: {1}]
  %8 = xla_tuple %s6, %s7
  %s9 = sld [smem:[#allocation0]]
  $region62: #{tpu_custom_call.1} parent=0
    _
  %s11 = ssub.s32 1, %s9
  %s12 = scalar_select 0, %s11, %s9
  $region1: #{tpu_custom_call.1} parent=0
    #allocation2 [shape = 'u8[4096]{0}', space=vmem, size = 0x1000, scoped, tag = 'input window, operand 0, single buffered']
    #allocation3 [shape = 's32[1]{0}', space=sflag, size = 0x4, scoped, tag = 'scoped memory for tpu_custom_call.1']
    #allocation4 [shape = 's32[1]{0}', space=sflag, size = 0x4, scoped, tag = 'scoped memory for tpu_custom_call.1']
    #allocation5 [shape = 'u8[4096]{0}', space=vmem, size = 0x1000, scoped, tag = 'input window, operand 1, single buffered']
    #allocation6 [shape = 's32[1]{0}', space=sflag, size = 0x4, scoped, tag = 'scoped memory for tpu_custom_call.1']
    #allocation7 [shape = 'u8[4096]{0}', space=vmem, size = 0x1000, scoped, tag = 'input window, operand 2, single buffered']
    #allocation8 [shape = 'u8[32768]{0}', space=vmem, size = 0x8000, scoped, tag = 'input window, operand 3, single buffered']
    #allocation9 [shape = 's32[1]{0}', space=sflag, size = 0x4, scoped, tag = 'scoped memory for tpu_custom_call.1']
    #allocation10 [shape = 'u8[262144]{0}', space=vmem, size = 0x40000, scoped, tag = 'input window, operand 4, single buffered']
    #allocation11 [shape = 'u8[4096]{0}', space=vmem, size = 0x1000, scoped, tag = 'output window, operand 0, single buffered']
    #allocation12 [shape = 'u8[4096]{0}', space=vmem, size = 0x1000, scoped, tag = 'output window, operand 1, single buffered']
    #allocation13 [shape = 's32[1]{0}', space=sflag, size = 0x4, scoped, tag = 'scoped memory for tpu_custom_call.1']
    %13 = vsyncpa [#allocation3], 0
    %14 = vsyncpa [#allocation6], 0
    %15 = vsyncpa [#allocation9], 0
    %16 = vsyncpa [#allocation4], 0
    %17 = vsyncpa [#allocation13], 0
    // Predicated region
    $region2: #{tpu_custom_call.1} parent=1 // pred_check
      _
    $region3: #{tpu_custom_call.1} parent=1 // pred_check_branch
      %19 = sbr.rel (0) target = $region5
    $region4: #{tpu_custom_call.1} parent=1 // pred_region
      %21 = vsyncadd [#allocation3], 0
      %s23 = sshll.u32 %s0, 4
      %s24 = int_to_ptr.hbm [resolvable:$true] %s23
      %s25 = sshll.u32 [#allocation2], 4
      %s26 = int_to_ptr.vmem [resolvable:$true] %s25
      %28 = dma.hbm_to_vmem [thread:$0]  %s24, 128, %s26, [#allocation3]
    $region5: #{tpu_custom_call.1} parent=1 // pred_fallthru
      _
    // Predicated region
    $region6: #{tpu_custom_call.1} parent=1 // pred_check
      _
    $region7: #{tpu_custom_call.1} parent=1 // pred_check_branch
      %30 = sbr.rel (0) target = $region9
    $region8: #{tpu_custom_call.1} parent=1 // pred_region
      %32 = vsyncadd [#allocation6], 0
      %s34 = sshll.u32 %s1, 4
      %s35 = int_to_ptr.hbm [resolvable:$true] %s34
      %s36 = sshll.u32 [#allocation5], 4
      %s37 = int_to_ptr.vmem [resolvable:$true] %s36
      %39 = dma.hbm_to_vmem [thread:$0]  %s35, 128, %s37, [#allocation6]
    $region9: #{tpu_custom_call.1} parent=1 // pred_fallthru
      _
    // Predicated region
    $region10: #{tpu_custom_call.1} parent=1 // pred_check
      _
    $region11: #{tpu_custom_call.1} parent=1 // pred_check_branch
      %41 = sbr.rel (0) target = $region13
    $region12: #{tpu_custom_call.1} parent=1 // pred_region
      %43 = vsyncadd [#allocation6], 0
      %s45 = sshll.u32 %s2, 4
      %s46 = int_to_ptr.hbm [resolvable:$true] %s45
      %s47 = sshll.u32 [#allocation7], 4
      %s48 = int_to_ptr.vmem [resolvable:$true] %s47
      %50 = dma.hbm_to_vmem [thread:$0]  %s46, 128, %s48, [#allocation6]
    $region13: #{tpu_custom_call.1} parent=1 // pred_fallthru
      _
    // Predicated region
    $region14: #{tpu_custom_call.1} parent=1 // pred_check
      _
    $region15: #{tpu_custom_call.1} parent=1 // pred_check_branch
      %52 = sbr.rel (0) target = $region17
    $region16: #{tpu_custom_call.1} parent=1 // pred_region
      %54 = vsyncadd [#allocation9], 0
      %s55 = sshll.u32 %s3, 4
      %s56 = int_to_ptr.hbm [resolvable:$true] %s55
      %s57 = sshll.u32 [#allocation8], 4
      %s58 = int_to_ptr.vmem [resolvable:$true] %s57
      %63 = dma.hbm_to_vmem [thread:$0]  %s56, 1024, %s58, [#allocation9], 512, 512, 32
    $region17: #{tpu_custom_call.1} parent=1 // pred_fallthru
      _
    // Predicated region
    $region18: #{tpu_custom_call.1} parent=1 // pred_check
      _
    $region19: #{tpu_custom_call.1} parent=1 // pred_check_branch
      %65 = sbr.rel (0) target = $region21
    $region20: #{tpu_custom_call.1} parent=1 // pred_region
      %67 = vsyncadd [#allocation9], 0
      %s68 = sshll.u32 %s4, 4
      %s69 = int_to_ptr.hbm [resolvable:$true] %s68
      %s70 = sshll.u32 [#allocation10], 4
      %s71 = int_to_ptr.vmem [resolvable:$true] %s70
      %76 = dma.hbm_to_vmem [thread:$0]  %s69, 8192, %s71, [#allocation9], 512, 512, 32
    $region21: #{tpu_custom_call.1} parent=1 // pred_fallthru
      _
    // Predicated region
    $region22: #{tpu_custom_call.1} parent=1 // pred_check
      _
    $region23: #{tpu_custom_call.1} parent=1 // pred_check_branch
      %78 = sbr.rel (0) target = $region25
    $region24: #{tpu_custom_call.1} parent=1 // pred_region
      _
    $region25: #{tpu_custom_call.1} parent=1 // pred_fallthru
      _
    // Predicated region
    $region26: #{tpu_custom_call.1} parent=1 // pred_check
      _
    $region27: #{tpu_custom_call.1} parent=1 // pred_check_branch
      %80 = sbr.rel (0) target = $region29
    $region28: #{tpu_custom_call.1} parent=1 // pred_region
      %82 = dma.done [#allocation3], 128
    $region29: #{tpu_custom_call.1} parent=1 // pred_fallthru
      _
    // Predicated region
    $region30: #{tpu_custom_call.1} parent=1 // pred_check
      _
    $region31: #{tpu_custom_call.1} parent=1 // pred_check_branch
      %84 = sbr.rel (0) target = $region33
    $region32: #{tpu_custom_call.1} parent=1 // pred_region
      %86 = dma.done [#allocation6], 128
    $region33: #{tpu_custom_call.1} parent=1 // pred_fallthru
      _
    // Predicated region
    $region34: #{tpu_custom_call.1} parent=1 // pred_check
      _
    $region35: #{tpu_custom_call.1} parent=1 // pred_check_branch
      %88 = sbr.rel (0) target = $region37
    $region36: #{tpu_custom_call.1} parent=1 // pred_region
      %90 = dma.done [#allocation6], 128
    $region37: #{tpu_custom_call.1} parent=1 // pred_fallthru
      _
    // Predicated region
    $region38: #{tpu_custom_call.1} parent=1 // pred_check
      _
    $region39: #{tpu_custom_call.1} parent=1 // pred_check_branch
      %92 = sbr.rel (0) target = $region41
    $region40: #{tpu_custom_call.1} parent=1 // pred_region
      %94 = dma.done [#allocation9], 1024
    $region41: #{tpu_custom_call.1} parent=1 // pred_fallthru
      _
    // Predicated region
    $region42: #{tpu_custom_call.1} parent=1 // pred_check
      _
    $region43: #{tpu_custom_call.1} parent=1 // pred_check_branch
      %96 = sbr.rel (0) target = $region45
    $region44: #{tpu_custom_call.1} parent=1 // pred_region
      %98 = dma.done [#allocation9], 8192
    $region45: #{tpu_custom_call.1} parent=1 // pred_fallthru
      _
    %v99 = vld [vmem:[#allocation2] sm:$0xff]
    %v100 = vld [vmem:[#allocation8] sm:$0xff]
    %v101 = vld [vmem:[#allocation8 + $0x8] sm:$0xff]
    %v102 = vld [vmem:[#allocation8 + $0x10] sm:$0xff]
    %v103 = vld [vmem:[#allocation8 + $0x18] sm:$0xff]
    %v104 = vld [vmem:[#allocation8 + $0x20] sm:$0xff]
    %v105 = vld [vmem:[#allocation8 + $0x28] sm:$0xff]
    %v106 = vld [vmem:[#allocation8 + $0x30] sm:$0xff]
    %v107 = vld [vmem:[#allocation8 + $0x38] sm:$0xff]
    %v108 = vld [vmem:[#allocation5] sm:$0xff]
    %v109 = vld [vmem:[#allocation10] sm:$0xff]
    %v110 = vld [vmem:[#allocation10 + $0x8] sm:$0xff]
    %v111 = vld [vmem:[#allocation10 + $0x10] sm:$0xff]
    %v112 = vld [vmem:[#allocation10 + $0x18] sm:$0xff]
    %v113 = vld [vmem:[#allocation10 + $0x20] sm:$0xff]
    %v114 = vld [vmem:[#allocation10 + $0x28] sm:$0xff]
    %v115 = vld [vmem:[#allocation10 + $0x30] sm:$0xff]
    %v116 = vld [vmem:[#allocation10 + $0x38] sm:$0xff]
    %v117 = vld [vmem:[#allocation10 + $0x40] sm:$0xff]
    %v118 = vld [vmem:[#allocation10 + $0x48] sm:$0xff]
    %v119 = vld [vmem:[#allocation10 + $0x50] sm:$0xff]
    %v120 = vld [vmem:[#allocation10 + $0x58] sm:$0xff]
    %v121 = vld [vmem:[#allocation10 + $0x60] sm:$0xff]
    %v122 = vld [vmem:[#allocation10 + $0x68] sm:$0xff]
    %v123 = vld [vmem:[#allocation10 + $0x70] sm:$0xff]
    %v124 = vld [vmem:[#allocation10 + $0x78] sm:$0xff]
    %v125 = vld [vmem:[#allocation10 + $0x80] sm:$0xff]
    %v126 = vld [vmem:[#allocation10 + $0x88] sm:$0xff]
    %v127 = vld [vmem:[#allocation10 + $0x90] sm:$0xff]
    %v128 = vld [vmem:[#allocation10 + $0x98] sm:$0xff]
    %v129 = vld [vmem:[#allocation10 + $0xa0] sm:$0xff]
    %v130 = vld [vmem:[#allocation10 + $0xa8] sm:$0xff]
    %v131 = vld [vmem:[#allocation10 + $0xb0] sm:$0xff]
    %v132 = vld [vmem:[#allocation10 + $0xb8] sm:$0xff]
    %v133 = vld [vmem:[#allocation10 + $0xc0] sm:$0xff]
    %v134 = vld [vmem:[#allocation10 + $0xc8] sm:$0xff]
    %v135 = vld [vmem:[#allocation10 + $0xd0] sm:$0xff]
    %v136 = vld [vmem:[#allocation10 + $0xd8] sm:$0xff]
    %v137 = vld [vmem:[#allocation10 + $0xe0] sm:$0xff]
    %v138 = vld [vmem:[#allocation10 + $0xe8] sm:$0xff]
    %v139 = vld [vmem:[#allocation10 + $0xf0] sm:$0xff]
    %v140 = vld [vmem:[#allocation10 + $0xf8] sm:$0xff]
    %v141 = vld [vmem:[#allocation10 + $0x100] sm:$0xff]
    %v142 = vld [vmem:[#allocation10 + $0x108] sm:$0xff]
    %v143 = vld [vmem:[#allocation10 + $0x110] sm:$0xff]
    %v144 = vld [vmem:[#allocation10 + $0x118] sm:$0xff]
    %v145 = vld [vmem:[#allocation10 + $0x120] sm:$0xff]
    %v146 = vld [vmem:[#allocation10 + $0x128] sm:$0xff]
    %v147 = vld [vmem:[#allocation10 + $0x130] sm:$0xff]
    %v148 = vld [vmem:[#allocation10 + $0x138] sm:$0xff]
    %v149 = vld [vmem:[#allocation10 + $0x140] sm:$0xff]
    %v150 = vld [vmem:[#allocation10 + $0x148] sm:$0xff]
    %v151 = vld [vmem:[#allocation10 + $0x150] sm:$0xff]
    %v152 = vld [vmem:[#allocation10 + $0x158] sm:$0xff]
    %v153 = vld [vmem:[#allocation10 + $0x160] sm:$0xff]
    %v154 = vld [vmem:[#allocation10 + $0x168] sm:$0xff]
    %v155 = vld [vmem:[#allocation10 + $0x170] sm:$0xff]
    %v156 = vld [vmem:[#allocation10 + $0x178] sm:$0xff]
    %v157 = vld [vmem:[#allocation10 + $0x180] sm:$0xff]
    %v158 = vld [vmem:[#allocation10 + $0x188] sm:$0xff]
    %v159 = vld [vmem:[#allocation10 + $0x190] sm:$0xff]
    %v160 = vld [vmem:[#allocation10 + $0x198] sm:$0xff]
    %v161 = vld [vmem:[#allocation10 + $0x1a0] sm:$0xff]
    %v162 = vld [vmem:[#allocation10 + $0x1a8] sm:$0xff]
    %v163 = vld [vmem:[#allocation10 + $0x1b0] sm:$0xff]
    %v164 = vld [vmem:[#allocation10 + $0x1b8] sm:$0xff]
    %v165 = vld [vmem:[#allocation10 + $0x1c0] sm:$0xff]
    %v166 = vld [vmem:[#allocation10 + $0x1c8] sm:$0xff]
    %v167 = vld [vmem:[#allocation10 + $0x1d0] sm:$0xff]
    %v168 = vld [vmem:[#allocation10 + $0x1d8] sm:$0xff]
    %v169 = vld [vmem:[#allocation10 + $0x1e0] sm:$0xff]
    %v170 = vld [vmem:[#allocation10 + $0x1e8] sm:$0xff]
    %v171 = vld [vmem:[#allocation10 + $0x1f0] sm:$0xff]
    %v172 = vld [vmem:[#allocation10 + $0x1f8] sm:$0xff]
    %173 = vmatpush.msra.mxu0 %v169
    %174 = vmatpush.msra.mxu0 %v165
    %175 = vmatpush.msra.mxu0 %v161
    %176 = vmatpush.msra.mxu0 %v157
    %177 = vmatpush.msra.mxu0 %v153
    %178 = vmatpush.msra.mxu0 %v149
    %179 = vmatpush.msra.mxu0 %v145
    %180 = vmatpush.msra.mxu0 %v141
    %181 = vmatpush.msra.mxu0 %v137
    %182 = vmatpush.msra.mxu0 %v133
    %183 = vmatpush.msra.mxu0 %v129
    %184 = vmatpush.msra.mxu0 %v125
    %185 = vmatpush.msra.mxu0 %v121
    %186 = vmatpush.msra.mxu0 %v117
    %187 = vmatpush.msra.mxu0 %v113
    %188 = vmatpush.msra.mxu0 %v109
    %189 = vmatmul.f32.gmra.mxu0 %v108
    %v190 = vpop.f32.mrf.mxu0
    %v191 = vadd.f32 0.0, %v190
    %192 = vdwg.mxu0
    %193 = vmatpush.msra.mxu0 %v170
    %194 = vmatpush.msra.mxu0 %v166
    %195 = vmatpush.msra.mxu0 %v162
    %196 = vmatpush.msra.mxu0 %v158
    %197 = vmatpush.msra.mxu0 %v154
    %198 = vmatpush.msra.mxu0 %v150
    %199 = vmatpush.msra.mxu0 %v146
    %200 = vmatpush.msra.mxu0 %v142
    %201 = vmatpush.msra.mxu0 %v138
    %202 = vmatpush.msra.mxu0 %v134
    %203 = vmatpush.msra.mxu0 %v130
    %204 = vmatpush.msra.mxu0 %v126
    %205 = vmatpush.msra.mxu0 %v122
    %206 = vmatpush.msra.mxu0 %v118
    %207 = vmatpush.msra.mxu0 %v114
    %208 = vmatpush.msra.mxu0 %v110
    %209 = vmatmul.f32.gmra.mxu0 %v108
    %v210 = vpop.f32.mrf.mxu0
    %v211 = vadd.f32 0.0, %v210
    %212 = vdwg.mxu0
    %213 = vmatpush.msra.mxu0 %v171
    %214 = vmatpush.msra.mxu0 %v167
    %215 = vmatpush.msra.mxu0 %v163
    %216 = vmatpush.msra.mxu0 %v159
    %217 = vmatpush.msra.mxu0 %v155
    %218 = vmatpush.msra.mxu0 %v151
    %219 = vmatpush.msra.mxu0 %v147
    %220 = vmatpush.msra.mxu0 %v143
    %221 = vmatpush.msra.mxu0 %v139
    %222 = vmatpush.msra.mxu0 %v135
    %223 = vmatpush.msra.mxu0 %v131
    %224 = vmatpush.msra.mxu0 %v127
    %225 = vmatpush.msra.mxu0 %v123
    %226 = vmatpush.msra.mxu0 %v119
    %227 = vmatpush.msra.mxu0 %v115
    %228 = vmatpush.msra.mxu0 %v111
    %229 = vmatmul.f32.gmra.mxu0 %v108
    %v230 = vpop.f32.mrf.mxu0
    %v231 = vadd.f32 0.0, %v230
    %232 = vdwg.mxu0
    %233 = vmatpush.msra.mxu0 %v172
    %234 = vmatpush.msra.mxu0 %v168
    %235 = vmatpush.msra.mxu0 %v164
    %236 = vmatpush.msra.mxu0 %v160
    %237 = vmatpush.msra.mxu0 %v156
    %238 = vmatpush.msra.mxu0 %v152
    %239 = vmatpush.msra.mxu0 %v148
    %240 = vmatpush.msra.mxu0 %v144
    %241 = vmatpush.msra.mxu0 %v140
    %242 = vmatpush.msra.mxu0 %v136
    %243 = vmatpush.msra.mxu0 %v132
    %244 = vmatpush.msra.mxu0 %v128
    %245 = vmatpush.msra.mxu0 %v124
    %246 = vmatpush.msra.mxu0 %v120
    %247 = vmatpush.msra.mxu0 %v116
    %248 = vmatpush.msra.mxu0 %v112
    %249 = vmatmul.f32.gmra.mxu0 %v108
    %v250 = vpop.f32.mrf.mxu0
    %v251 = vadd.f32 0.0, %v250
    %252 = vdwg.mxu0
    %vm253 = vcmask 130048
    %v255 = vsel %vm253, %v99, 0
    %257 = vmatpush.msra.mxu0 0.0
    %258 = vmatpush.msra.mxu0 0.0
    %259 = vmatpush.msra.mxu0 0.0
    %260 = vmatpush.msra.mxu0 0.0
    %261 = vmatpush.msra.mxu0 0.0
    %262 = vmatpush.msra.mxu0 0.0
    %263 = vmatpush.msra.mxu0 0.0
    %264 = vmatpush.msra.mxu0 0.0
    %265 = vmatpush.msra.mxu0 0.0
    %266 = vmatpush.msra.mxu0 0.0
    %267 = vmatpush.msra.mxu0 0.0
    %268 = vmatpush.msra.mxu0 0.0
    %269 = vmatpush.msra.mxu0 0.0
    %270 = vmatpush.msra.mxu0 0.0
    %271 = vmatpush.msra.mxu0 %v104
    %272 = vmatpush.msra.mxu0 %v100
    %273 = vmatmul.f32.gmra.mxu0 %v255
    %v274 = vpop.f32.mrf.mxu0
    %v275 = vadd.f32 %v191, %v274
    %276 = vdwg.mxu0
    %277 = vmatpush.msra.mxu0 0.0
    %278 = vmatpush.msra.mxu0 0.0
    %279 = vmatpush.msra.mxu0 0.0
    %280 = vmatpush.msra.mxu0 0.0
    %281 = vmatpush.msra.mxu0 0.0
    %282 = vmatpush.msra.mxu0 0.0
    %283 = vmatpush.msra.mxu0 0.0
    %284 = vmatpush.msra.mxu0 0.0
    %285 = vmatpush.msra.mxu0 0.0
    %286 = vmatpush.msra.mxu0 0.0
    %287 = vmatpush.msra.mxu0 0.0
    %288 = vmatpush.msra.mxu0 0.0
    %289 = vmatpush.msra.mxu0 0.0
    %290 = vmatpush.msra.mxu0 0.0
    %291 = vmatpush.msra.mxu0 %v105
    %292 = vmatpush.msra.mxu0 %v101
    %293 = vmatmul.f32.gmra.mxu0 %v255
    %v294 = vpop.f32.mrf.mxu0
    %v295 = vadd.f32 %v211, %v294
    %296 = vdwg.mxu0
    %297 = vmatpush.msra.mxu0 0.0
    %298 = vmatpush.msra.mxu0 0.0
    %299 = vmatpush.msra.mxu0 0.0
    %300 = vmatpush.msra.mxu0 0.0
    %301 = vmatpush.msra.mxu0 0.0
    %302 = vmatpush.msra.mxu0 0.0
    %303 = vmatpush.msra.mxu0 0.0
    %304 = vmatpush.msra.mxu0 0.0
    %305 = vmatpush.msra.mxu0 0.0
    %306 = vmatpush.msra.mxu0 0.0
    %307 = vmatpush.msra.mxu0 0.0
    %308 = vmatpush.msra.mxu0 0.0
    %309 = vmatpush.msra.mxu0 0.0
    %310 = vmatpush.msra.mxu0 0.0
    %311 = vmatpush.msra.mxu0 %v106
    %312 = vmatpush.msra.mxu0 %v102
    %313 = vmatmul.f32.gmra.mxu0 %v255
    %v314 = vpop.f32.mrf.mxu0
    %v315 = vadd.f32 %v231, %v314
    %316 = vdwg.mxu0
    %317 = vmatpush.msra.mxu0 0.0
    %318 = vmatpush.msra.mxu0 0.0
    %319 = vmatpush.msra.mxu0 0.0
    %320 = vmatpush.msra.mxu0 0.0
    %321 = vmatpush.msra.mxu0 0.0
    %322 = vmatpush.msra.mxu0 0.0
    %323 = vmatpush.msra.mxu0 0.0
    %324 = vmatpush.msra.mxu0 0.0
    %325 = vmatpush.msra.mxu0 0.0
    %326 = vmatpush.msra.mxu0 0.0
    %327 = vmatpush.msra.mxu0 0.0
    %328 = vmatpush.msra.mxu0 0.0
    %329 = vmatpush.msra.mxu0 0.0
    %330 = vmatpush.msra.mxu0 0.0
    %331 = vmatpush.msra.mxu0 %v107
    %332 = vmatpush.msra.mxu0 %v103
    %333 = vmatmul.f32.gmra.mxu0 %v255
    %v334 = vpop.f32.mrf.mxu0
    %v335 = vadd.f32 %v251, %v334
    %336 = vdwg.mxu0
    %v337 = vld [vmem:[%s5] sm:$0xf]
    %v339 = vperm.slane %v337, 0
    %v340 = vperm.slane %v337, 1
    %v341 = vperm.slane %v337, 2
    %v342 = vperm.slane %v337, 3
    %v347 = vadd.f32 %v275, %v339
    %v348 = vadd.f32 %v295, %v340
    %v349 = vadd.f32 %v315, %v341
    %v350 = vadd.f32 %v335, %v342
    %v351 = vmul.f32 %v347, 0.5
    %v352 = vtanh.pop %v351
    %v353 = vadd.f32 %v352, 1.0
    %v354 = vmul.f32 %v353, 0.5
    %v355 = vmul.f32 %v348, 0.5
    %v356 = vtanh.pop %v355
    %v357 = vadd.f32 %v356, 1.0
    %v358 = vmul.f32 %v357, 0.5
    %v359 = vmul.f32 %v349, 0.5
    %v360 = vtanh.pop %v359
    %v361 = vadd.f32 %v360, 1.0
    %v362 = vmul.f32 %v361, 0.5
    %v363 = vtanh.pop %v350
    %v364 = vld [vmem:[#allocation7] sm:$0xff]
    %v365 = vmul.f32 %v358, %v364
    %v366 = vmul.f32 %v354, %v363
    %v367 = vadd.f32 %v365, %v366
    %v368 = vtanh.pop %v367
    %v369 = vmul.f32 %v362, %v368
    %370 = vst [vmem:[#allocation11] sm:$0xff] %v367
    %371 = vst [vmem:[#allocation12] sm:$0xff] %v369
    // Predicated region
    $region46: #{tpu_custom_call.1} parent=1 // pred_check
      _
    $region47: #{tpu_custom_call.1} parent=1 // pred_check_branch
      %373 = sbr.rel (0) target = $region49
    $region48: #{tpu_custom_call.1} parent=1 // pred_region
      %375 = vsyncadd [#allocation4], 0
      %s377 = sshll.u32 [#allocation11], 4
      %s378 = int_to_ptr.vmem [resolvable:$true] %s377
      %s379 = sshll.u32 %s6, 4
      %s380 = int_to_ptr.hbm [resolvable:$true] %s379
      %382 = dma.vmem_to_hbm [thread:$0]  %s378, 128, %s380, [#allocation4]
    $region49: #{tpu_custom_call.1} parent=1 // pred_fallthru
      _
    // Predicated region
    $region50: #{tpu_custom_call.1} parent=1 // pred_check
      _
    $region51: #{tpu_custom_call.1} parent=1 // pred_check_branch
      %384 = sbr.rel (0) target = $region53
    $region52: #{tpu_custom_call.1} parent=1 // pred_region
      %386 = vsyncadd [#allocation13], 0
      %s388 = sshll.u32 [#allocation12], 4
      %s389 = int_to_ptr.vmem [resolvable:$true] %s388
      %s390 = sshll.u32 %s7, 4
      %s391 = int_to_ptr.hbm [resolvable:$true] %s390
      %393 = dma.vmem_to_hbm [thread:$0]  %s389, 128, %s391, [#allocation13]
    $region53: #{tpu_custom_call.1} parent=1 // pred_fallthru
      _
    // Predicated region
    $region54: #{tpu_custom_call.1} parent=1 // pred_check
      _
    $region55: #{tpu_custom_call.1} parent=1 // pred_check_branch
      %395 = sbr.rel (0) target = $region57
    $region56: #{tpu_custom_call.1} parent=1 // pred_region
      %397 = dma.done [#allocation4], 128
    $region57: #{tpu_custom_call.1} parent=1 // pred_fallthru
      _
    // Predicated region
    $region58: #{tpu_custom_call.1} parent=1 // pred_check
      _
    $region59: #{tpu_custom_call.1} parent=1 // pred_check_branch
      %399 = sbr.rel (0) target = $region61
    $region60: #{tpu_custom_call.1} parent=1 // pred_region
      %401 = dma.done [#allocation13], 128
    $region61: #{tpu_custom_call.1} parent=1 // pred_fallthru
      _
    %402 = vsyncpa [#allocation3], 1
    %403 = vsyncpa [#allocation6], 1
    %404 = vsyncpa [#allocation9], 1
    %405 = vsyncpa [#allocation4], 1
    %406 = vsyncpa [#allocation13], 1

</llo_original>
